<compile_context>
chip_gen: v5e
topology: v5e:2x2
jax: 0.10.0
libtpu: 0.0.40
codegen_flags: <defaults>
</compile_context>

<pallas_src>
import functools

import jax
import jax.numpy as jnp
import numpy as np
from jax import lax
from jax.experimental import pallas as pl
from jax.experimental.pallas import tpu as pltpu


def hd_inverse_kernel(x_ref, w1t_ref, w2_ref, w1p_ref, bias_ref, out_ref, *, mxu_dtype):
    """One batch tile: hnet forward + analytic backward of sum(H), permuted output.

    x_ref   : (TB, 2D)  input state [q | p]              (any float dtype)
    w1t_ref : (2D, H)   W1^T, f32 (first matmul kept f32 to preserve state precision)
    w2_ref  : (H, H)    W2, shared by forward (contract dim 1) and backward (dim 0)
    w1p_ref : (H, 2D)   cat((-W1[:, D:], W1[:, :D]), 1) -- chunk/negate/concat baked in
    bias_ref: (8, H)    row 0 = b1, row 1 = b2, row 2 = W3 (final Linear(H,1) weight)
    out_ref : (TB, 2D)
    """
    x = x_ref[...].astype(jnp.float32)
    b1 = bias_ref[0:1, :]
    b2 = bias_ref[1:2, :]
    w3 = bias_ref[2:3, :]

    # ---- forward pass of hnet (only the intermediates are needed) ----
    z1 = jnp.dot(x, w1t_ref[...], preferred_element_type=jnp.float32) + b1
    h1 = jnp.tanh(z1)                                                   # (TB, H) f32
    z2 = lax.dot_general(h1.astype(mxu_dtype), w2_ref[...],             # h1 @ W2^T
                         dimension_numbers=(((1,), (1,)), ((), ())),
                         preferred_element_type=jnp.float32) + b2
    h2 = jnp.tanh(z2)                                                   # (TB, H) f32

    # ---- analytic gradient of sum(H) w.r.t. x (replaces torch.autograd.grad) ----
    g2 = (1.0 - h2 * h2) * w3                                           # dL/dz2
    g1 = lax.dot_general(g2.astype(mxu_dtype), w2_ref[...],             # g2 @ W2
                         dimension_numbers=(((1,), (0,)), ((), ())),
                         preferred_element_type=jnp.float32) * (1.0 - h1 * h1)

    # ---- out = cat((-dp, dq), axis=1), folded into the permuted weight ----
    out = jnp.dot(g1.astype(mxu_dtype), w1p_ref[...],
                  preferred_element_type=jnp.float32)                   # (TB, 2D)
    out_ref[...] = out.astype(out_ref.dtype)


def prepare_params(params, *, mxu_dtype=jnp.float32):
    """One-time weight transforms. Call ONCE per ODE solve, outside the step loop."""
    w1, b1, w2, b2, w3 = params
    hid, two_d = w1.shape
    d = two_d // 2
    w1t = jnp.transpose(w1).astype(jnp.float32)                         # (2D, H) fwd, f32
    w2m = jnp.asarray(w2, mxu_dtype)                                    # (H, H)  fwd+bwd
    w1p = jnp.concatenate((-w1[:, d:], w1[:, :d]), axis=1).astype(mxu_dtype)  # (H, 2D)
    biases = jnp.zeros((8, hid), jnp.float32)                           # 8 sublanes
    biases = biases.at[0].set(jnp.reshape(b1, (hid,)).astype(jnp.float32))
    biases = biases.at[1].set(jnp.reshape(b2, (hid,)).astype(jnp.float32))
    biases = biases.at[2].set(jnp.reshape(w3, (hid,)).astype(jnp.float32))
    return (w1t, w2m, w1p, biases)


def _pick_tile_b(batch, tile_b):
    """Multiple-of-8 batch tile; keep >=2 grid steps when the batch allows it."""
    tile_b = max(8, (min(int(tile_b), 2048) // 8) * 8)
    b8 = ((batch + 7) // 8) * 8
    tile_b = min(tile_b, b8)
    if b8 >= 16 and pl.cdiv(batch, tile_b) < 2:    # v7x: don't leave a TensorCore idle
        tile_b = ((b8 // 2 + 7) // 8) * 8
    return tile_b


def hd_inverse_net(t, x, prepared, *, tile_b=1024, out_dtype=None):
    """Mirror of HDInverseNet.forward(t, x). `t` is unused (as in PyTorch).

    `prepared` is the output of prepare_params(); a raw 5-tuple is also accepted
    (prepared on the fly -- avoid inside an integrator loop).
    """
    del t
    if len(prepared) == 5:          # convenience path; hoist prepare_params() yourself
        prepared = prepare_params(prepared)
    w1t, w2m, w1p, biases = prepared

    B, two_d = x.shape
    hid = w2m.shape[0]
    out_dtype = x.dtype if out_dtype is None else out_dtype
    mxu_dtype = w2m.dtype

    tile_b = _pick_tile_b(B, tile_b)
    grid = (pl.cdiv(B, tile_b),)    # ragged last block handled by Pallas (no pad copy)

    kernel = functools.partial(hd_inverse_kernel, mxu_dtype=mxu_dtype)

    wbytes = sum(int(a.size) * a.dtype.itemsize for a in (w1t, w2m, w1p, biases))
    cost = pl.CostEstimate(
        flops=2 * B * (2 * two_d * hid + 2 * hid * hid),
        transcendentals=2 * B * hid,
        bytes_accessed=B * two_d * (x.dtype.itemsize + jnp.dtype(out_dtype).itemsize)
        + wbytes,
    )

    const = lambda i: (0, 0)
    return pl.pallas_call(
        kernel,
        out_shape=jax.ShapeDtypeStruct((B, two_d), out_dtype),
        grid_spec=pltpu.PrefetchScalarGridSpec(
            num_scalar_prefetch=0,
            grid=grid,
            in_specs=[
                pl.BlockSpec((tile_b, two_d), lambda i: (i, 0)),   # x tile (pipelined)
                pl.BlockSpec((two_d, hid), const),                 # W1^T     (resident)
                pl.BlockSpec((hid, hid), const),                   # W2       (resident)
                pl.BlockSpec((hid, two_d), const),                 # W1_perm  (resident)
                pl.BlockSpec((8, hid), const),                     # [b1; b2; w3; 0...]
            ],
            out_specs=pl.BlockSpec((tile_b, two_d), lambda i: (i, 0)),
        ),
        compiler_params=pltpu.CompilerParams(
            dimension_semantics=("parallel",),
        ),
        cost_estimate=cost,
    )(x, w1t, w2m, w1p, biases)


def make_params(key, two_d, hidden):
    """Deterministic synthetic hnet parameters (PyTorch Linear weight layout)."""
    k1, k2, k3, k4, k5 = jax.random.split(key, 5)
    w1 = jax.random.normal(k1, (hidden, two_d), jnp.float32) * 0.2
    b1 = jax.random.normal(k2, (1, hidden), jnp.float32) * 0.1
    w2 = jax.random.normal(k3, (hidden, hidden), jnp.float32) * 0.2
    b2 = jax.random.normal(k4, (1, hidden), jnp.float32) * 0.1
    w3 = jax.random.normal(k5, (1, hidden), jnp.float32) * 0.2
    return (w1, b1, w2, b2, w3)


def _reference(t, x, params):
    """Pure-JAX reference using autodiff, mirroring the torch.autograd.grad path."""
    del t
    w1, b1, w2, b2, w3 = params

    def hnet_sum(q_p):
        h1 = jnp.tanh(q_p @ w1.T + b1)
        h2 = jnp.tanh(h1 @ w2.T + b2)
        H = h2 @ w3.T  # final bias irrelevant for the gradient
        return jnp.sum(H)

    dH = jax.grad(hnet_sum)(x)
    d = x.shape[1] // 2
    dq, dp = dH[:, :d], dH[:, d:]
    return jnp.concatenate((-dp, dq), axis=1)


if __name__ == "__main__":
    # Small but MXU/lane-friendly shapes: x = [q | p] -> (B, 2*D) with 2D = 128.
    B, D, HID = 256, 64, 128
    key = jax.random.PRNGKey(0)
    kx, kp = jax.random.split(key)
    x = jax.random.normal(kx, (B, 2 * D), jnp.float32)
    t = jnp.float32(0.0)            # unused, kept for signature parity
    params = make_params(kp, 2 * D, HID)

    ref = jax.block_until_ready(_reference(t, x, params))

    # f32 path; tile_b=64 -> grid of 4 (>=2 pipelined steps per v7x TensorCore).
    prep_f32 = prepare_params(params)                      # hoisted, one-time
    fwd_f32 = jax.jit(functools.partial(hd_inverse_net, tile_b=64))
    out_f32 = jax.block_until_ready(fwd_f32(t, x, prep_f32))
    np.testing.assert_allclose(np.asarray(out_f32), np.asarray(ref),
                               rtol=2e-3, atol=2e-3)

    # bf16 resident weights + bf16 state/output I/O (bandwidth mode); the first-layer
    # matmul, all accumulations, and tanh stay in f32 inside the kernel.
    prep_bf16 = prepare_params(params, mxu_dtype=jnp.bfloat16)
    fwd_bf16 = jax.jit(functools.partial(hd_inverse_net, tile_b=64,
                                         out_dtype=jnp.bfloat16))
    out_bf16 = jax.block_until_ready(fwd_bf16(t, x.astype(jnp.bfloat16), prep_bf16))
    np.testing.assert_allclose(np.asarray(out_bf16, dtype=np.float32), np.asarray(ref),
                               rtol=5e-2, atol=5e-2)

    print("KERNEL_OK")
</pallas_src>

<mosaic_0001>
module attributes {stable_mosaic.version = 11 : i64} {
  func.func @hd_inverse_kernel(%arg0: i32, %arg1: memref<64x128xf32, #tpu.memory_space<vmem>>, %arg2: memref<128x128xf32, #tpu.memory_space<vmem>>, %arg3: memref<128x128xf32, #tpu.memory_space<vmem>>, %arg4: memref<128x128xf32, #tpu.memory_space<vmem>>, %arg5: memref<8x128xf32, #tpu.memory_space<vmem>>, %arg6: memref<64x128xf32, #tpu.memory_space<vmem>>) attributes {dimension_semantics = [#tpu.dimension_semantics<parallel>], iteration_bounds = array<i64: 4>, scalar_prefetch = 0 : i64, scratch_operands = 0 : i64, tpu.core_type = #tpu.core_type<tc>, window_params = [{transform_indices = @transform_0, window_bounds = array<i64: 64, 128>}, {pipeline_mode = #tpu.pipeline_mode<synchronous>, transform_indices = @transform_1, window_bounds = array<i64: 128, 128>}, {pipeline_mode = #tpu.pipeline_mode<synchronous>, transform_indices = @transform_2, window_bounds = array<i64: 128, 128>}, {pipeline_mode = #tpu.pipeline_mode<synchronous>, transform_indices = @transform_3, window_bounds = array<i64: 128, 128>}, {pipeline_mode = #tpu.pipeline_mode<synchronous>, transform_indices = @transform_4, window_bounds = array<i64: 8, 128>}, {transform_indices = @transform_5, window_bounds = array<i64: 64, 128>}]} {
    %c0 = arith.constant 0 : index
    %c0_0 = arith.constant 0 : index
    %0 = vector.load %arg1[%c0, %c0_0] : memref<64x128xf32, #tpu.memory_space<vmem>>, vector<64x128xf32>
    %c0_1 = arith.constant 0 : index
    %c0_2 = arith.constant 0 : index
    %1 = vector.load %arg5[%c0_1, %c0_2] : memref<8x128xf32, #tpu.memory_space<vmem>>, vector<1x128xf32>
    %c1 = arith.constant 1 : index
    %c0_3 = arith.constant 0 : index
    %2 = vector.load %arg5[%c1, %c0_3] : memref<8x128xf32, #tpu.memory_space<vmem>>, vector<1x128xf32>
    %c2 = arith.constant 2 : index
    %c0_4 = arith.constant 0 : index
    %3 = vector.load %arg5[%c2, %c0_4] : memref<8x128xf32, #tpu.memory_space<vmem>>, vector<1x128xf32>
    %c0_5 = arith.constant 0 : index
    %c0_6 = arith.constant 0 : index
    %4 = vector.load %arg2[%c0_5, %c0_6] : memref<128x128xf32, #tpu.memory_space<vmem>>, vector<128x128xf32>
    %cst = arith.constant dense<0.000000e+00> : vector<64x128xf32>
    %5 = tpu.matmul %0, %4, %cst {dimension_numbers = #tpu.dot_dimension_numbers<[1], [0], [0], [1], [0, 0, 1, 1], [], []>} : vector<64x128xf32>, vector<128x128xf32>, vector<64x128xf32> -> vector<64x128xf32>
    %6 = vector.broadcast %1 : vector<1x128xf32> to vector<64x128xf32>
    %7 = arith.addf %5, %6 : vector<64x128xf32>
    %8 = math.tanh %7 : vector<64x128xf32>
    %c0_7 = arith.constant 0 : index
    %c0_8 = arith.constant 0 : index
    %9 = vector.load %arg3[%c0_7, %c0_8] : memref<128x128xf32, #tpu.memory_space<vmem>>, vector<128x128xf32>
    %cst_9 = arith.constant dense<0.000000e+00> : vector<64x128xf32>
    %10 = tpu.matmul %8, %9, %cst_9 {dimension_numbers = #tpu.dot_dimension_numbers<[1], [1], [0], [0], [0, 0, 1, 0], [], []>} : vector<64x128xf32>, vector<128x128xf32>, vector<64x128xf32> -> vector<64x128xf32>
    %11 = vector.broadcast %2 : vector<1x128xf32> to vector<64x128xf32>
    %12 = arith.addf %10, %11 : vector<64x128xf32>
    %13 = math.tanh %12 : vector<64x128xf32>
    %14 = arith.mulf %13, %13 : vector<64x128xf32>
    %cst_10 = arith.constant 1.000000e+00 : f32
    %15 = vector.broadcast %cst_10 : f32 to vector<64x128xf32>
    %16 = arith.subf %15, %14 : vector<64x128xf32>
    %17 = vector.broadcast %3 : vector<1x128xf32> to vector<64x128xf32>
    %18 = arith.mulf %16, %17 : vector<64x128xf32>
    %c0_11 = arith.constant 0 : index
    %c0_12 = arith.constant 0 : index
    %19 = vector.load %arg3[%c0_11, %c0_12] : memref<128x128xf32, #tpu.memory_space<vmem>>, vector<128x128xf32>
    %cst_13 = arith.constant dense<0.000000e+00> : vector<64x128xf32>
    %20 = tpu.matmul %18, %19, %cst_13 {dimension_numbers = #tpu.dot_dimension_numbers<[1], [0], [0], [1], [0, 0, 1, 1], [], []>} : vector<64x128xf32>, vector<128x128xf32>, vector<64x128xf32> -> vector<64x128xf32>
    %21 = arith.mulf %8, %8 : vector<64x128xf32>
    %cst_14 = arith.constant 1.000000e+00 : f32
    %22 = vector.broadcast %cst_14 : f32 to vector<64x128xf32>
    %23 = arith.subf %22, %21 : vector<64x128xf32>
    %24 = arith.mulf %20, %23 : vector<64x128xf32>
    %c0_15 = arith.constant 0 : index
    %c0_16 = arith.constant 0 : index
    %25 = vector.load %arg4[%c0_15, %c0_16] : memref<128x128xf32, #tpu.memory_space<vmem>>, vector<128x128xf32>
    %cst_17 = arith.constant dense<0.000000e+00> : vector<64x128xf32>
    %26 = tpu.matmul %24, %25, %cst_17 {dimension_numbers = #tpu.dot_dimension_numbers<[1], [0], [0], [1], [0, 0, 1, 1], [], []>} : vector<64x128xf32>, vector<128x128xf32>, vector<64x128xf32> -> vector<64x128xf32>
    %c0_18 = arith.constant 0 : index
    %c0_19 = arith.constant 0 : index
    %27 = vector.load %arg6[%c0_18, %c0_19] : memref<64x128xf32, #tpu.memory_space<vmem>>, vector<64x128xf32>
    tpu.vector_store %arg6[%c0_18, %c0_19], %26 {strides = array<i32>} : memref<64x128xf32, #tpu.memory_space<vmem>>, vector<64x128xf32>,
    return
  }
  func.func @transform_0(%arg0: i32) -> (i32, i32) {
    %c0_i32 = arith.constant 0 : i32
    %c0_i32_0 = arith.constant 0 : i32
    return %arg0, %c0_i32 : i32, i32
  }
  func.func @transform_1(%arg0: i32) -> (i32, i32) {
    %c0_i32 = arith.constant 0 : i32
    %c0_i32_0 = arith.constant 0 : i32
    %c0_i32_1 = arith.constant 0 : i32
    return %c0_i32, %c0_i32_0 : i32, i32
  }
  func.func @transform_2(%arg0: i32) -> (i32, i32) {
    %c0_i32 = arith.constant 0 : i32
    %c0_i32_0 = arith.constant 0 : i32
    %c0_i32_1 = arith.constant 0 : i32
    return %c0_i32, %c0_i32_0 : i32, i32
  }
  func.func @transform_3(%arg0: i32) -> (i32, i32) {
    %c0_i32 = arith.constant 0 : i32
    %c0_i32_0 = arith.constant 0 : i32
    %c0_i32_1 = arith.constant 0 : i32
    return %c0_i32, %c0_i32_0 : i32, i32
  }
  func.func @transform_4(%arg0: i32) -> (i32, i32) {
    %c0_i32 = arith.constant 0 : i32
    %c0_i32_0 = arith.constant 0 : i32
    %c0_i32_1 = arith.constant 0 : i32
    return %c0_i32, %c0_i32_0 : i32, i32
  }
  func.func @transform_5(%arg0: i32) -> (i32, i32) {
    %c0_i32 = arith.constant 0 : i32
    %c0_i32_0 = arith.constant 0 : i32
    return %arg0, %c0_i32 : i32, i32
  }
}

</mosaic_0001>

<llo_original>
// kernel: hd_inverse_net.1
$region0: #{hd_inverse_net.1}
  #allocation0 [shape = 'u32[]', space=smem, size = 0x4, offset = 0x4, fixed_abs, tag = 'smem constant byte address 0x4 - core index']
  #allocation1 [shape = 'u32[72,128]{1,0:T(1,128)}', space=vmem, size = 0x9000, scoped, tag = 'internal scratch']
  %s0 = inlined_call_operand.hbm [shape: f32[256,128], index: 0, kind: input, shape index: {}]
  %s1 = inlined_call_operand.hbm [shape: f32[128,128], index: 1, kind: input, shape index: {}]
  %s2 = inlined_call_operand.hbm [shape: f32[128,128], index: 2, kind: input, shape index: {}]
  %s3 = inlined_call_operand.hbm [shape: f32[128,128], index: 3, kind: input, shape index: {}]
  %s4 = inlined_call_operand.hbm [shape: f32[8,128], index: 4, kind: input, shape index: {}]
  %s5 = inlined_call_operand.hbm [shape: f32[256,128], index: 5, kind: output, shape index: {}]
  %s6 = sld [smem:[#allocation0]]
  $region73: #{hd_inverse_net.1} parent=0
    _
  %s8 = ssub.s32 1, %s6
  %s9 = scalar_select 0, %s8, %s6
  $region1: #{hd_inverse_net.1} parent=0
    #allocation2 [shape = 'u8[65536]{0}', space=vmem, size = 0x10000, scoped, tag = 'input window, operand 0']
    #allocation3 [shape = 's32[2]{0}', space=sflag, size = 0x8, scoped, tag = 'scoped memory for hd_inverse_net.1']
    #allocation4 [shape = 's32[2]{0}', space=sflag, size = 0x8, scoped, tag = 'scoped memory for hd_inverse_net.1']
    #allocation5 [shape = 'u8[65536]{0}', space=vmem, size = 0x10000, scoped, tag = 'input window, operand 1, single buffered']
    #allocation6 [shape = 's32[1]{0}', space=sflag, size = 0x4, scoped, tag = 'scoped memory for hd_inverse_net.1']
    #allocation7 [shape = 'u8[65536]{0}', space=vmem, size = 0x10000, scoped, tag = 'input window, operand 2, single buffered']
    #allocation8 [shape = 'u8[65536]{0}', space=vmem, size = 0x10000, scoped, tag = 'input window, operand 3, single buffered']
    #allocation9 [shape = 's32[1]{0}', space=sflag, size = 0x4, scoped, tag = 'scoped memory for hd_inverse_net.1']
    #allocation10 [shape = 'u8[4096]{0}', space=vmem, size = 0x1000, scoped, tag = 'input window, operand 4, single buffered']
    #allocation11 [shape = 'u8[65536]{0}', space=vmem, size = 0x10000, scoped, tag = 'output window, operand 0']
    %10 = vsyncpa [#allocation3], 0
    %s11 = scalar_lea.sflag [#allocation3], 1
    %12 = vsyncpa %s11, 0
    %13 = vsyncpa [#allocation6], 0
    %14 = vsyncpa [#allocation9], 0
    %15 = vsyncpa [#allocation4], 0
    %s16 = scalar_lea.sflag [#allocation4], 1
    %17 = vsyncpa %s16, 0
    loop: start=0, step=1, limit=6
    $region2: #{hd_inverse_net.1} parent=1 // loop_pre_header
      _
    $region3: #{hd_inverse_net.1} parent=1 // loop_header
      %s19 = sphi 0, %s23
      %p20 = scmp.ge.s32.totalorder %s19, 6
      %s29 = sphi 0, %s31
      %s32 = sphi 0, %s29
      %s33 = sphi 0, %s32
      %s49 = sphi 0, %s33
      %s53 = sphi 0, %s53
      %s55 = sphi 0, %s53
      %s56 = sphi 0, %s55
      %s70 = sphi 0, %s56
      %s74 = sphi 0, %s74
      %s76 = sphi 0, %s74
      %s77 = sphi 0, %s76
      %s91 = sphi 0, %s77
      %s95 = sphi 0, %s95
      %s97 = sphi 0, %s95
      %s98 = sphi 0, %s97
      %s112 = sphi 0, %s98
      %s116 = sphi 0, %s116
      %s118 = sphi 0, %s116
      %s119 = sphi 0, %s118
      %s133 = sphi 0, %s119
      %s139 = sphi 0, %s141
      %s142 = sphi 0, %s139
      %s143 = sphi 0, %s142
      %s159 = sphi 0, %s143
    $region4: #{hd_inverse_net.1} parent=1 // loop_header_branch
      %22 = sbr.rel (%p20) target = $region8
    $region5: #{hd_inverse_net.1} parent=1 // loop_body
      %s24 = ssub.s32 %s19, 1
      %s25 = ssub.s32 %s19, 2
      %s26 = sadd.s32 %s19, 1
      %s27 = ssub.s32 %s19, %s26
      %p28 = scmp.eq.s32.totalorder %s27, 0
      %s30 = sadd.s32 %s29, 1
      %s31 = scalar_select %p28, %s29, %s30
      %p34 = pneg %p28
      %p35 = scmp.eq.s32.totalorder %s19, 3
      %p36 = por %p34, %p35
      %p37 = scmp.ne.s32.totalorder %s29, %s32
      %p38 = scmp.eq.s32.totalorder %s19, 0
      %p39 = por %p37, %p38
      %p40 = scmp.ne.s32.totalorder %s29, %s32
      %p41 = scmp.eq.s32.totalorder %s24, 3
      %p42 = por %p40, %p41
      %p43 = scmp.ne.s32.totalorder %s32, %s33
      %p44 = scmp.eq.s32.totalorder %s24, 0
      %p45 = por %p43, %p44
      %p46 = scmp.ne.s32.totalorder %s32, %s33
      %p47 = scmp.eq.s32.totalorder %s25, 3
      %p48 = por %p46, %p47
      %p50 = scmp.ne.s32.totalorder %s33, %s49
      %p51 = scmp.eq.s32.totalorder %s25, 0
      %p52 = por %p50, %p51
      %s54 = sadd.s32 %s53, 1
      %p57 = scmp.eq.s32.totalorder %s19, 3
      %p58 = scmp.ne.s32.totalorder %s53, %s55
      %p59 = scmp.eq.s32.totalorder %s19, 0
      %p60 = por %p58, %p59
      %p61 = scmp.ne.s32.totalorder %s53, %s55
      %p62 = scmp.eq.s32.totalorder %s24, 3
      %p63 = por %p61, %p62
      %p64 = scmp.ne.s32.totalorder %s55, %s56
      %p65 = scmp.eq.s32.totalorder %s24, 0
      %p66 = por %p64, %p65
      %p67 = scmp.ne.s32.totalorder %s55, %s56
      %p68 = scmp.eq.s32.totalorder %s25, 3
      %p69 = por %p67, %p68
      %p71 = scmp.ne.s32.totalorder %s56, %s70
      %p72 = scmp.eq.s32.totalorder %s25, 0
      %p73 = por %p71, %p72
      %s75 = sadd.s32 %s74, 1
      %p78 = scmp.eq.s32.totalorder %s19, 3
      %p79 = scmp.ne.s32.totalorder %s74, %s76
      %p80 = scmp.eq.s32.totalorder %s19, 0
      %p81 = por %p79, %p80
      %p82 = scmp.ne.s32.totalorder %s74, %s76
      %p83 = scmp.eq.s32.totalorder %s24, 3
      %p84 = por %p82, %p83
      %p85 = scmp.ne.s32.totalorder %s76, %s77
      %p86 = scmp.eq.s32.totalorder %s24, 0
      %p87 = por %p85, %p86
      %p88 = scmp.ne.s32.totalorder %s76, %s77
      %p89 = scmp.eq.s32.totalorder %s25, 3
      %p90 = por %p88, %p89
      %p92 = scmp.ne.s32.totalorder %s77, %s91
      %p93 = scmp.eq.s32.totalorder %s25, 0
      %p94 = por %p92, %p93
      %s96 = sadd.s32 %s95, 1
      %p99 = scmp.eq.s32.totalorder %s19, 3
      %p100 = scmp.ne.s32.totalorder %s95, %s97
      %p101 = scmp.eq.s32.totalorder %s19, 0
      %p102 = por %p100, %p101
      %p103 = scmp.ne.s32.totalorder %s95, %s97
      %p104 = scmp.eq.s32.totalorder %s24, 3
      %p105 = por %p103, %p104
      %p106 = scmp.ne.s32.totalorder %s97, %s98
      %p107 = scmp.eq.s32.totalorder %s24, 0
      %p108 = por %p106, %p107
      %p109 = scmp.ne.s32.totalorder %s97, %s98
      %p110 = scmp.eq.s32.totalorder %s25, 3
      %p111 = por %p109, %p110
      %p113 = scmp.ne.s32.totalorder %s98, %s112
      %p114 = scmp.eq.s32.totalorder %s25, 0
      %p115 = por %p113, %p114
      %s117 = sadd.s32 %s116, 1
      %p120 = scmp.eq.s32.totalorder %s19, 3
      %p121 = scmp.ne.s32.totalorder %s116, %s118
      %p122 = scmp.eq.s32.totalorder %s19, 0
      %p123 = por %p121, %p122
      %p124 = scmp.ne.s32.totalorder %s116, %s118
      %p125 = scmp.eq.s32.totalorder %s24, 3
      %p126 = por %p124, %p125
      %p127 = scmp.ne.s32.totalorder %s118, %s119
      %p128 = scmp.eq.s32.totalorder %s24, 0
      %p129 = por %p127, %p128
      %p130 = scmp.ne.s32.totalorder %s118, %s119
      %p131 = scmp.eq.s32.totalorder %s25, 3
      %p132 = por %p130, %p131
      %p134 = scmp.ne.s32.totalorder %s119, %s133
      %p135 = scmp.eq.s32.totalorder %s25, 0
      %p136 = por %p134, %p135
      %s137 = ssub.s32 %s19, %s26
      %p138 = scmp.eq.s32.totalorder %s137, 0
      %s140 = sadd.s32 %s139, 1
      %s141 = scalar_select %p138, %s139, %s140
      %p144 = pneg %p138
      %p145 = scmp.eq.s32.totalorder %s19, 3
      %p146 = por %p144, %p145
      %p147 = scmp.ne.s32.totalorder %s139, %s142
      %p148 = scmp.eq.s32.totalorder %s19, 0
      %p149 = por %p147, %p148
      %p150 = scmp.ne.s32.totalorder %s139, %s142
      %p151 = scmp.eq.s32.totalorder %s24, 3
      %p152 = por %p150, %p151
      %p153 = scmp.ne.s32.totalorder %s142, %s143
      %p154 = scmp.eq.s32.totalorder %s24, 0
      %p155 = por %p153, %p154
      %p156 = scmp.ne.s32.totalorder %s142, %s143
      %p157 = scmp.eq.s32.totalorder %s25, 3
      %p158 = por %p156, %p157
      %p160 = scmp.ne.s32.totalorder %s143, %s159
      %p161 = scmp.eq.s32.totalorder %s25, 0
      %p162 = por %p160, %p161
      %p163 = scmp.le.s32.totalorder 1, %s19
      %p164 = scmp.lt.s32.totalorder %s19, 5
      %p165 = pnand %p163, %p164
      %p166 = pneg %p165
      // Predicated region
      $region9: #{hd_inverse_net.1} parent=5 // pred_check
        _
      $region10: #{hd_inverse_net.1} parent=5 // pred_check_branch
        %168 = sbr.rel (%p165) target = $region12
      $region11: #{hd_inverse_net.1} parent=5 // pred_region
        %s169 = ssub.s32 %s19, 1
        // Predicated region
        $region13: #{hd_inverse_net.1} parent=11 // pred_check
          %p170 = pneg %p66
        $region14: #{hd_inverse_net.1} parent=11 // pred_check_branch
          %172 = sbr.rel (%p170) target = $region16
        $region15: #{hd_inverse_net.1} parent=11 // pred_region
          %174 = vsyncadd [#allocation6], 0
          %s175 = sshll.u32 %s1, 4
          %s176 = int_to_ptr.hbm [resolvable:$true] %s175
          %s177 = sshll.u32 [#allocation5], 4
          %s178 = int_to_ptr.vmem [resolvable:$true] %s177
          %183 = dma.hbm_to_vmem [thread:$0]  %s176, 2048, %s178, [#allocation6], 128, 128, 8
        $region16: #{hd_inverse_net.1} parent=11 // pred_fallthru
          _
        // Predicated region
        $region17: #{hd_inverse_net.1} parent=11 // pred_check
          %p184 = pneg %p87
        $region18: #{hd_inverse_net.1} parent=11 // pred_check_branch
          %186 = sbr.rel (%p184) target = $region20
        $region19: #{hd_inverse_net.1} parent=11 // pred_region
          %188 = vsyncadd [#allocation6], 0
          %s189 = sshll.u32 %s2, 4
          %s190 = int_to_ptr.hbm [resolvable:$true] %s189
          %s191 = sshll.u32 [#allocation7], 4
          %s192 = int_to_ptr.vmem [resolvable:$true] %s191
          %197 = dma.hbm_to_vmem [thread:$0]  %s190, 2048, %s192, [#allocation6], 128, 128, 8
        $region20: #{hd_inverse_net.1} parent=11 // pred_fallthru
          _
        // Predicated region
        $region21: #{hd_inverse_net.1} parent=11 // pred_check
          %p198 = pneg %p108
        $region22: #{hd_inverse_net.1} parent=11 // pred_check_branch
          %200 = sbr.rel (%p198) target = $region24
        $region23: #{hd_inverse_net.1} parent=11 // pred_region
          %202 = vsyncadd [#allocation9], 0
          %s203 = sshll.u32 %s3, 4
          %s204 = int_to_ptr.hbm [resolvable:$true] %s203
          %s205 = sshll.u32 [#allocation8], 4
          %s206 = int_to_ptr.vmem [resolvable:$true] %s205
          %211 = dma.hbm_to_vmem [thread:$0]  %s204, 2048, %s206, [#allocation9], 128, 128, 8
        $region24: #{hd_inverse_net.1} parent=11 // pred_fallthru
          _
        // Predicated region
        $region25: #{hd_inverse_net.1} parent=11 // pred_check
          %p212 = pneg %p129
        $region26: #{hd_inverse_net.1} parent=11 // pred_check_branch
          %214 = sbr.rel (%p212) target = $region28
        $region27: #{hd_inverse_net.1} parent=11 // pred_region
          %216 = vsyncadd [#allocation9], 0
          %s218 = sshll.u32 %s4, 4
          %s219 = int_to_ptr.hbm [resolvable:$true] %s218
          %s220 = sshll.u32 [#allocation10], 4
          %s221 = int_to_ptr.vmem [resolvable:$true] %s220
          %223 = dma.hbm_to_vmem [thread:$0]  %s219, 128, %s221, [#allocation9]
        $region28: #{hd_inverse_net.1} parent=11 // pred_fallthru
          _
      $region12: #{hd_inverse_net.1} parent=5 // pred_fallthru
        _
      %p224 = scmp.lt.s32.totalorder %s19, 4
      // Predicated region
      $region29: #{hd_inverse_net.1} parent=5 // pred_check
        %p225 = pneg %p224
      $region30: #{hd_inverse_net.1} parent=5 // pred_check_branch
        %227 = sbr.rel (%p225) target = $region32
      $region31: #{hd_inverse_net.1} parent=5 // pred_region
        // Predicated region
        $region33: #{hd_inverse_net.1} parent=31 // pred_check
          %p228 = pneg %p39
        $region34: #{hd_inverse_net.1} parent=31 // pred_check_branch
          %230 = sbr.rel (%p228) target = $region36
        $region35: #{hd_inverse_net.1} parent=31 // pred_region
          %s231 = sand.u32 %s29, 1
          %s232 = scalar_lea.sflag [#allocation3], %s231
          %s233 = sand.u32 %s29, 1
          %s234 = smul.addr %s233, 64
          %s235 = scalar_lea.vmem [#allocation2], %s234
          %s236 = smul.u32 8, %s19
          %238 = vsyncadd %s232, 0
          %s239 = smul.addr %s236, 8
          %s240 = scalar_lea.hbm %s0, %s239
          %s241 = sshll.u32 %s240, 4
          %s242 = int_to_ptr.hbm [resolvable:$true] %s241
          %s243 = sshll.u32 %s235, 4
          %s244 = int_to_ptr.vmem [resolvable:$true] %s243
          %249 = dma.hbm_to_vmem [thread:$0]  %s242, 1024, %s244, %s232, 128, 128, 8
        $region36: #{hd_inverse_net.1} parent=31 // pred_fallthru
          _
      $region32: #{hd_inverse_net.1} parent=5 // pred_fallthru
        _
      %p250 = scmp.le.s32.totalorder 1, %s19
      %p251 = scmp.lt.s32.totalorder %s19, 5
      %p252 = pnand %p250, %p251
      %p253 = pneg %p252
      // Predicated region
      $region37: #{hd_inverse_net.1} parent=5 // pred_check
        _
      $region38: #{hd_inverse_net.1} parent=5 // pred_check_branch
        %255 = sbr.rel (%p252) target = $region40
      $region39: #{hd_inverse_net.1} parent=5 // pred_region
        %s256 = ssub.s32 %s19, 1
        %s257 = sand.u32 %s32, 1
        %s258 = scalar_lea.sflag [#allocation3], %s257
        %s259 = sand.u32 %s32, 1
        %s260 = smul.addr %s259, 64
        %s261 = scalar_lea.vmem [#allocation2], %s260
        // Predicated region
        $region41: #{hd_inverse_net.1} parent=39 // pred_check
          %p262 = pneg %p45
        $region42: #{hd_inverse_net.1} parent=39 // pred_check_branch
          %264 = sbr.rel (%p262) target = $region44
        $region43: #{hd_inverse_net.1} parent=39 // pred_region
          %266 = dma.done %s258, 1024
        $region44: #{hd_inverse_net.1} parent=39 // pred_fallthru
          _
        // Predicated region
        $region45: #{hd_inverse_net.1} parent=39 // pred_check
          %p267 = pneg %p66
        $region46: #{hd_inverse_net.1} parent=39 // pred_check_branch
          %269 = sbr.rel (%p267) target = $region48
        $region47: #{hd_inverse_net.1} parent=39 // pred_region
          %271 = dma.done [#allocation6], 2048
        $region48: #{hd_inverse_net.1} parent=39 // pred_fallthru
          _
        // Predicated region
        $region49: #{hd_inverse_net.1} parent=39 // pred_check
          %p272 = pneg %p87
        $region50: #{hd_inverse_net.1} parent=39 // pred_check_branch
          %274 = sbr.rel (%p272) target = $region52
        $region51: #{hd_inverse_net.1} parent=39 // pred_region
          %276 = dma.done [#allocation6], 2048
        $region52: #{hd_inverse_net.1} parent=39 // pred_fallthru
          _
        // Predicated region
        $region53: #{hd_inverse_net.1} parent=39 // pred_check
          %p277 = pneg %p108
        $region54: #{hd_inverse_net.1} parent=39 // pred_check_branch
          %279 = sbr.rel (%p277) target = $region56
        $region55: #{hd_inverse_net.1} parent=39 // pred_region
          %281 = dma.done [#allocation9], 2048
        $region56: #{hd_inverse_net.1} parent=39 // pred_fallthru
          _
        // Predicated region
        $region57: #{hd_inverse_net.1} parent=39 // pred_check
          %p282 = pneg %p129
        $region58: #{hd_inverse_net.1} parent=39 // pred_check_branch
          %284 = sbr.rel (%p282) target = $region60
        $region59: #{hd_inverse_net.1} parent=39 // pred_region
          %286 = dma.done [#allocation9], 128
        $region60: #{hd_inverse_net.1} parent=39 // pred_fallthru
          _
        %s287 = sand.u32 %s32, 1
        %s288 = scalar_lea.sflag [#allocation3], %s287
        %s289 = sand.u32 %s32, 1
        %s290 = smul.addr %s289, 64
        %s291 = scalar_lea.vmem [#allocation2], %s290
        %p292 = pneg %p45
        %p293 = pneg %p42
        %p294 = pneg %p66
        %p295 = pneg %p63
        %p296 = pneg %p87
        %p297 = pneg %p84
        %p298 = pneg %p108
        %p299 = pneg %p105
        %p300 = pneg %p129
        %p301 = pneg %p126
        %p302 = pneg %p155
        %p303 = pneg %p152
        %s304 = sand.u32 %s142, 1
        %s305 = scalar_lea.sflag [#allocation4], %s304
        %s306 = sand.u32 %s142, 1
        %s307 = smul.addr %s306, 64
        %s308 = scalar_lea.vmem [#allocation11], %s307
        %s309 = smul.u32 8, %s24
        %s310 = smul.u32 8, %s24
        %v311 = vld [vmem:[%s261] sm:$0xff]
        %v312 = vld [vmem:[%s261 + $0x8] sm:$0xff]
        %v313 = vld [vmem:[%s261 + $0x10] sm:$0xff]
        %v314 = vld [vmem:[%s261 + $0x18] sm:$0xff]
        %v315 = vld [vmem:[%s261 + $0x20] sm:$0xff]
        %v316 = vld [vmem:[%s261 + $0x28] sm:$0xff]
        %v317 = vld [vmem:[%s261 + $0x30] sm:$0xff]
        %v318 = vld [vmem:[%s261 + $0x38] sm:$0xff]
        %v319 = vld [vmem:[#allocation10] sm:$0x1]
        %v320 = vld [vmem:[#allocation10 + $0x1] sm:$0x1]
        %v321 = vld [vmem:[#allocation10 + $0x2] sm:$0x1]
        %v322 = vld [vmem:[#allocation5] sm:$0xff]
        %v323 = vld [vmem:[#allocation5 + $0x8] sm:$0xff]
        %v324 = vld [vmem:[#allocation5 + $0x10] sm:$0xff]
        %v325 = vld [vmem:[#allocation5 + $0x18] sm:$0xff]
        %v326 = vld [vmem:[#allocation5 + $0x20] sm:$0xff]
        %v327 = vld [vmem:[#allocation5 + $0x28] sm:$0xff]
        %v328 = vld [vmem:[#allocation5 + $0x30] sm:$0xff]
        %v329 = vld [vmem:[#allocation5 + $0x38] sm:$0xff]
        %v330 = vld [vmem:[#allocation5 + $0x40] sm:$0xff]
        %v331 = vld [vmem:[#allocation5 + $0x48] sm:$0xff]
        %v332 = vld [vmem:[#allocation5 + $0x50] sm:$0xff]
        %v333 = vld [vmem:[#allocation5 + $0x58] sm:$0xff]
        %v334 = vld [vmem:[#allocation5 + $0x60] sm:$0xff]
        %v335 = vld [vmem:[#allocation5 + $0x68] sm:$0xff]
        %v336 = vld [vmem:[#allocation5 + $0x70] sm:$0xff]
        %v337 = vld [vmem:[#allocation5 + $0x78] sm:$0xff]
        %v338 = vperm.slane %v319, 0
        %339 = vmatpush.msra.mxu0 %v337
        %340 = vmatpush.msra.mxu0 %v336
        %341 = vmatpush.msra.mxu0 %v335
        %342 = vmatpush.msra.mxu0 %v334
        %343 = vmatpush.msra.mxu0 %v333
        %344 = vmatpush.msra.mxu0 %v332
        %345 = vmatpush.msra.mxu0 %v331
        %346 = vmatpush.msra.mxu0 %v330
        %347 = vmatpush.msra.mxu0 %v329
        %348 = vmatpush.msra.mxu0 %v328
        %349 = vmatpush.msra.mxu0 %v327
        %350 = vmatpush.msra.mxu0 %v326
        %351 = vmatpush.msra.mxu0 %v325
        %352 = vmatpush.msra.mxu0 %v324
        %353 = vmatpush.msra.mxu0 %v323
        %354 = vmatpush.msra.mxu0 %v322
        %355 = vmatmul.f32.gmra.mxu0 %v311
        %v356 = vpop.f32.mrf.mxu0
        %v357 = vadd.f32 %v338, %v356
        %358 = vmatmul.f32.gmra.mxu0 %v312
        %v359 = vpop.f32.mrf.mxu0
        %v360 = vadd.f32 %v338, %v359
        %361 = vmatmul.f32.gmra.mxu0 %v313
        %v362 = vpop.f32.mrf.mxu0
        %v363 = vadd.f32 %v338, %v362
        %364 = vmatmul.f32.gmra.mxu0 %v314
        %v365 = vpop.f32.mrf.mxu0
        %v366 = vadd.f32 %v338, %v365
        %367 = vmatmul.f32.gmra.mxu0 %v315
        %v368 = vpop.f32.mrf.mxu0
        %v369 = vadd.f32 %v338, %v368
        %370 = vmatmul.f32.gmra.mxu0 %v316
        %v371 = vpop.f32.mrf.mxu0
        %v372 = vadd.f32 %v338, %v371
        %373 = vmatmul.f32.gmra.mxu0 %v317
        %v374 = vpop.f32.mrf.mxu0
        %v375 = vadd.f32 %v338, %v374
        %376 = vmatmul.f32.gmra.mxu0 %v318
        %v377 = vpop.f32.mrf.mxu0
        %v378 = vadd.f32 %v338, %v377
        %379 = vdwg.mxu0
        %v380 = vtanh.pop %v357
        %v381 = vtanh.pop %v360
        %v382 = vtanh.pop %v363
        %v383 = vtanh.pop %v366
        %v384 = vtanh.pop %v369
        %v385 = vtanh.pop %v372
        %v386 = vtanh.pop %v375
        %v387 = vtanh.pop %v378
        %v388 = vld [vmem:[#allocation7] sm:$0xff]
        %v389 = vld [vmem:[#allocation7 + $0x8] sm:$0xff]
        %v390 = vld [vmem:[#allocation7 + $0x10] sm:$0xff]
        %v391 = vld [vmem:[#allocation7 + $0x18] sm:$0xff]
        %v392 = vld [vmem:[#allocation7 + $0x20] sm:$0xff]
        %v393 = vld [vmem:[#allocation7 + $0x28] sm:$0xff]
        %v394 = vld [vmem:[#allocation7 + $0x30] sm:$0xff]
        %v395 = vld [vmem:[#allocation7 + $0x38] sm:$0xff]
        %v396 = vld [vmem:[#allocation7 + $0x40] sm:$0xff]
        %v397 = vld [vmem:[#allocation7 + $0x48] sm:$0xff]
        %v398 = vld [vmem:[#allocation7 + $0x50] sm:$0xff]
        %v399 = vld [vmem:[#allocation7 + $0x58] sm:$0xff]
        %v400 = vld [vmem:[#allocation7 + $0x60] sm:$0xff]
        %v401 = vld [vmem:[#allocation7 + $0x68] sm:$0xff]
        %v402 = vld [vmem:[#allocation7 + $0x70] sm:$0xff]
        %v403 = vld [vmem:[#allocation7 + $0x78] sm:$0xff]
        %v404 = vperm.slane %v320, 0
        %405 = vmatpush.xpose.msra.mxu0 %v403
        %406 = vmatpush.xpose.msra.mxu0 %v402
        %407 = vmatpush.xpose.msra.mxu0 %v401
        %408 = vmatpush.xpose.msra.mxu0 %v400
        %409 = vmatpush.xpose.msra.mxu0 %v399
        %410 = vmatpush.xpose.msra.mxu0 %v398
        %411 = vmatpush.xpose.msra.mxu0 %v397
        %412 = vmatpush.xpose.msra.mxu0 %v396
        %413 = vmatpush.xpose.msra.mxu0 %v395
        %414 = vmatpush.xpose.msra.mxu0 %v394
        %415 = vmatpush.xpose.msra.mxu0 %v393
        %416 = vmatpush.xpose.msra.mxu0 %v392
        %417 = vmatpush.xpose.msra.mxu0 %v391
        %418 = vmatpush.xpose.msra.mxu0 %v390
        %419 = vmatpush.xpose.msra.mxu0 %v389
        %420 = vmatpush.xpose.msra.mxu0 %v388
        %421 = vmatmul.f32.gmra.mxu0 %v380
        %v422 = vpop.f32.mrf.mxu0
        %v423 = vadd.f32 %v404, %v422
        %424 = vmatmul.f32.gmra.mxu0 %v381
        %v425 = vpop.f32.mrf.mxu0
        %v426 = vadd.f32 %v404, %v425
        %427 = vmatmul.f32.gmra.mxu0 %v382
        %v428 = vpop.f32.mrf.mxu0
        %v429 = vadd.f32 %v404, %v428
        %430 = vmatmul.f32.gmra.mxu0 %v383
        %v431 = vpop.f32.mrf.mxu0
        %v432 = vadd.f32 %v404, %v431
        %433 = vmatmul.f32.gmra.mxu0 %v384
        %v434 = vpop.f32.mrf.mxu0
        %v435 = vadd.f32 %v404, %v434
        %436 = vmatmul.f32.gmra.mxu0 %v385
        %v437 = vpop.f32.mrf.mxu0
        %v438 = vadd.f32 %v404, %v437
        %439 = vmatmul.f32.gmra.mxu0 %v386
        %v440 = vpop.f32.mrf.mxu0
        %v441 = vadd.f32 %v404, %v440
        %442 = vmatmul.f32.gmra.mxu0 %v387
        %v443 = vpop.f32.mrf.mxu0
        %v444 = vadd.f32 %v404, %v443
        %445 = vdwg.mxu0
        %v446 = vtanh.pop %v423
        %v447 = vtanh.pop %v426
        %v448 = vtanh.pop %v429
        %v449 = vtanh.pop %v432
        %v450 = vtanh.pop %v435
        %v451 = vtanh.pop %v438
        %v452 = vtanh.pop %v441
        %v453 = vtanh.pop %v444
        %v454 = vmul.f32 %v446, %v446
        %v455 = vmul.f32 %v447, %v447
        %v456 = vmul.f32 %v448, %v448
        %v457 = vmul.f32 %v449, %v449
        %v458 = vmul.f32 %v450, %v450
        %v459 = vmul.f32 %v451, %v451
        %v460 = vmul.f32 %v452, %v452
        %v461 = vmul.f32 %v453, %v453
        %v462 = vsub.f32 1.0, %v454
        %v463 = vsub.f32 1.0, %v455
        %v464 = vsub.f32 1.0, %v456
        %v465 = vsub.f32 1.0, %v457
        %v466 = vsub.f32 1.0, %v458
        %v467 = vsub.f32 1.0, %v459
        %v468 = vsub.f32 1.0, %v460
        %v469 = vsub.f32 1.0, %v461
        %v470 = vperm.slane %v321, 0
        %v471 = vmul.f32 %v462, %v470
        %v472 = vmul.f32 %v463, %v470
        %v473 = vmul.f32 %v464, %v470
        %v474 = vmul.f32 %v465, %v470
        %v475 = vmul.f32 %v466, %v470
        %v476 = vmul.f32 %v467, %v470
        %v477 = vmul.f32 %v468, %v470
        %v478 = vmul.f32 %v469, %v470
        %479 = vmatpush.msra.mxu0 %v403
        %480 = vmatpush.msra.mxu0 %v402
        %481 = vmatpush.msra.mxu0 %v401
        %482 = vmatpush.msra.mxu0 %v400
        %483 = vmatpush.msra.mxu0 %v399
        %484 = vmatpush.msra.mxu0 %v398
        %485 = vmatpush.msra.mxu0 %v397
        %486 = vmatpush.msra.mxu0 %v396
        %487 = vmatpush.msra.mxu0 %v395
        %488 = vmatpush.msra.mxu0 %v394
        %489 = vmatpush.msra.mxu0 %v393
        %490 = vmatpush.msra.mxu0 %v392
        %491 = vmatpush.msra.mxu0 %v391
        %492 = vmatpush.msra.mxu0 %v390
        %493 = vmatpush.msra.mxu0 %v389
        %494 = vmatpush.msra.mxu0 %v388
        %495 = vmatmul.f32.gmra.mxu0 %v471
        %v496 = vpop.f32.mrf.mxu0
        %v497 = vadd.f32 0.0, %v496
        %498 = vmatmul.f32.gmra.mxu0 %v472
        %v499 = vpop.f32.mrf.mxu0
        %v500 = vadd.f32 0.0, %v499
        %501 = vmatmul.f32.gmra.mxu0 %v473
        %v502 = vpop.f32.mrf.mxu0
        %v503 = vadd.f32 0.0, %v502
        %504 = vmatmul.f32.gmra.mxu0 %v474
        %v505 = vpop.f32.mrf.mxu0
        %v506 = vadd.f32 0.0, %v505
        %507 = vmatmul.f32.gmra.mxu0 %v475
        %v508 = vpop.f32.mrf.mxu0
        %v509 = vadd.f32 0.0, %v508
        %510 = vmatmul.f32.gmra.mxu0 %v476
        %v511 = vpop.f32.mrf.mxu0
        %v512 = vadd.f32 0.0, %v511
        %513 = vmatmul.f32.gmra.mxu0 %v477
        %v514 = vpop.f32.mrf.mxu0
        %v515 = vadd.f32 0.0, %v514
        %516 = vmatmul.f32.gmra.mxu0 %v478
        %v517 = vpop.f32.mrf.mxu0
        %v518 = vadd.f32 0.0, %v517
        %519 = vdwg.mxu0
        %v520 = vmul.f32 %v380, %v380
        %v521 = vmul.f32 %v381, %v381
        %v522 = vmul.f32 %v382, %v382
        %v523 = vmul.f32 %v383, %v383
        %v524 = vmul.f32 %v384, %v384
        %v525 = vmul.f32 %v385, %v385
        %v526 = vmul.f32 %v386, %v386
        %v527 = vmul.f32 %v387, %v387
        %v528 = vsub.f32 1.0, %v520
        %v529 = vsub.f32 1.0, %v521
        %v530 = vsub.f32 1.0, %v522
        %v531 = vsub.f32 1.0, %v523
        %v532 = vsub.f32 1.0, %v524
        %v533 = vsub.f32 1.0, %v525
        %v534 = vsub.f32 1.0, %v526
        %v535 = vsub.f32 1.0, %v527
        %v536 = vmul.f32 %v497, %v528
        %v537 = vmul.f32 %v500, %v529
        %v538 = vmul.f32 %v503, %v530
        %v539 = vmul.f32 %v506, %v531
        %v540 = vmul.f32 %v509, %v532
        %v541 = vmul.f32 %v512, %v533
        %v542 = vmul.f32 %v515, %v534
        %v543 = vmul.f32 %v518, %v535
        %v544 = vld [vmem:[#allocation8] sm:$0xff]
        %v545 = vld [vmem:[#allocation8 + $0x8] sm:$0xff]
        %v546 = vld [vmem:[#allocation8 + $0x10] sm:$0xff]
        %v547 = vld [vmem:[#allocation8 + $0x18] sm:$0xff]
        %v548 = vld [vmem:[#allocation8 + $0x20] sm:$0xff]
        %v549 = vld [vmem:[#allocation8 + $0x28] sm:$0xff]
        %v550 = vld [vmem:[#allocation8 + $0x30] sm:$0xff]
        %v551 = vld [vmem:[#allocation8 + $0x38] sm:$0xff]
        %v552 = vld [vmem:[#allocation8 + $0x40] sm:$0xff]
        %v553 = vld [vmem:[#allocation8 + $0x48] sm:$0xff]
        %v554 = vld [vmem:[#allocation8 + $0x50] sm:$0xff]
        %v555 = vld [vmem:[#allocation8 + $0x58] sm:$0xff]
        %v556 = vld [vmem:[#allocation8 + $0x60] sm:$0xff]
        %v557 = vld [vmem:[#allocation8 + $0x68] sm:$0xff]
        %v558 = vld [vmem:[#allocation8 + $0x70] sm:$0xff]
        %v559 = vld [vmem:[#allocation8 + $0x78] sm:$0xff]
        %560 = vmatpush.msra.mxu0 %v559
        %561 = vmatpush.msra.mxu0 %v558
        %562 = vmatpush.msra.mxu0 %v557
        %563 = vmatpush.msra.mxu0 %v556
        %564 = vmatpush.msra.mxu0 %v555
        %565 = vmatpush.msra.mxu0 %v554
        %566 = vmatpush.msra.mxu0 %v553
        %567 = vmatpush.msra.mxu0 %v552
        %568 = vmatpush.msra.mxu0 %v551
        %569 = vmatpush.msra.mxu0 %v550
        %570 = vmatpush.msra.mxu0 %v549
        %571 = vmatpush.msra.mxu0 %v548
        %572 = vmatpush.msra.mxu0 %v547
        %573 = vmatpush.msra.mxu0 %v546
        %574 = vmatpush.msra.mxu0 %v545
        %575 = vmatpush.msra.mxu0 %v544
        %576 = vmatmul.f32.gmra.mxu0 %v536
        %v577 = vpop.f32.mrf.mxu0
        %v578 = vadd.f32 0.0, %v577
        %579 = vmatmul.f32.gmra.mxu0 %v537
        %v580 = vpop.f32.mrf.mxu0
        %v581 = vadd.f32 0.0, %v580
        %582 = vmatmul.f32.gmra.mxu0 %v538
        %v583 = vpop.f32.mrf.mxu0
        %v584 = vadd.f32 0.0, %v583
        %585 = vmatmul.f32.gmra.mxu0 %v539
        %v586 = vpop.f32.mrf.mxu0
        %v587 = vadd.f32 0.0, %v586
        %588 = vmatmul.f32.gmra.mxu0 %v540
        %v589 = vpop.f32.mrf.mxu0
        %v590 = vadd.f32 0.0, %v589
        %591 = vmatmul.f32.gmra.mxu0 %v541
        %v592 = vpop.f32.mrf.mxu0
        %v593 = vadd.f32 0.0, %v592
        %594 = vmatmul.f32.gmra.mxu0 %v542
        %v595 = vpop.f32.mrf.mxu0
        %v596 = vadd.f32 0.0, %v595
        %597 = vmatmul.f32.gmra.mxu0 %v543
        %v598 = vpop.f32.mrf.mxu0
        %v599 = vadd.f32 0.0, %v598
        %600 = vdwg.mxu0
        %601 = vst [vmem:[%s308] sm:$0xff] %v578
        %602 = vst [vmem:[%s308 + $0x8] sm:$0xff] %v581
        %603 = vst [vmem:[%s308 + $0x10] sm:$0xff] %v584
        %604 = vst [vmem:[%s308 + $0x18] sm:$0xff] %v587
        %605 = vst [vmem:[%s308 + $0x20] sm:$0xff] %v590
        %606 = vst [vmem:[%s308 + $0x28] sm:$0xff] %v593
        %607 = vst [vmem:[%s308 + $0x30] sm:$0xff] %v596
        %608 = vst [vmem:[%s308 + $0x38] sm:$0xff] %v599
        %s609 = sand.u32 %s142, 1
        %s610 = scalar_lea.sflag [#allocation4], %s609
        %s611 = sand.u32 %s142, 1
        %s612 = smul.addr %s611, 64
        %s613 = scalar_lea.vmem [#allocation11], %s612
        // Predicated region
        $region61: #{hd_inverse_net.1} parent=39 // pred_check
          %p614 = pneg %p152
        $region62: #{hd_inverse_net.1} parent=39 // pred_check_branch
          %616 = sbr.rel (%p614) target = $region64
        $region63: #{hd_inverse_net.1} parent=39 // pred_region
          %s617 = smul.u32 8, %s24
          %619 = vsyncadd %s610, 0
          %s620 = smul.addr %s617, 8
          %s621 = scalar_lea.hbm %s5, %s620
          %s622 = sshll.u32 %s613, 4
          %s623 = int_to_ptr.vmem [resolvable:$true] %s622
          %s624 = sshll.u32 %s621, 4
          %s625 = int_to_ptr.hbm [resolvable:$true] %s624
          %630 = dma.vmem_to_hbm [thread:$0]  %s623, 1024, %s625, %s610, 128, 128, 8
        $region64: #{hd_inverse_net.1} parent=39 // pred_fallthru
          _
      $region40: #{hd_inverse_net.1} parent=5 // pred_fallthru
        _
      %p631 = scmp.le.s32.totalorder 2, %s19
      // Predicated region
      $region65: #{hd_inverse_net.1} parent=5 // pred_check
        %p632 = pneg %p631
      $region66: #{hd_inverse_net.1} parent=5 // pred_check_branch
        %634 = sbr.rel (%p632) target = $region68
      $region67: #{hd_inverse_net.1} parent=5 // pred_region
        %s635 = ssub.s32 %s19, 2
        // Predicated region
        $region69: #{hd_inverse_net.1} parent=67 // pred_check
          %p636 = pneg %p158
        $region70: #{hd_inverse_net.1} parent=67 // pred_check_branch
          %638 = sbr.rel (%p636) target = $region72
        $region71: #{hd_inverse_net.1} parent=67 // pred_region
          %s639 = sand.u32 %s143, 1
          %s640 = scalar_lea.sflag [#allocation4], %s639
          %s641 = sand.u32 %s143, 1
          %s642 = smul.addr %s641, 64
          %s643 = scalar_lea.vmem [#allocation11], %s642
          %645 = dma.done %s640, 1024
        $region72: #{hd_inverse_net.1} parent=67 // pred_fallthru
          _
      $region68: #{hd_inverse_net.1} parent=5 // pred_fallthru
        _
    $region6: #{hd_inverse_net.1} parent=1 // loop_footer
      %s23 = sadd.s32 1, %s19
    $region7: #{hd_inverse_net.1} parent=1 // loop_footer_branch
      %18 = sbr.rel target = $region3
    $region8: #{hd_inverse_net.1} parent=1 // loop_exit
      _
    %646 = vsyncpa [#allocation3], 1
    %s647 = scalar_lea.sflag [#allocation3], 1
    %648 = vsyncpa %s647, 1
    %649 = vsyncpa [#allocation6], 1
    %650 = vsyncpa [#allocation9], 1
    %651 = vsyncpa [#allocation4], 1
    %s652 = scalar_lea.sflag [#allocation4], 1
    %653 = vsyncpa %s652, 1

</llo_original>
